<compile_context>
chip_gen: v7x
topology: tpu7x:2x2x1
jax: 0.10.0
libtpu: 0.0.40
codegen_flags: <defaults>
</compile_context>

<pallas_src>
import functools

import jax
import jax.numpy as jnp
from jax.experimental import pallas as pl
from jax.experimental.pallas import tpu as pltpu

LN_EPS = 1e-5
LANE = 128


def _round_up(n, m):
    return ((n + m - 1) // m) * m


def _layernorm_relu(h, gamma, beta):
    """Fused LayerNorm (biased var, eps inside rsqrt, PyTorch semantics) + ReLU."""
    inv_n = 1.0 / h.shape[-1]                       # compile-time constant
    s = jnp.sum(h, axis=-1, keepdims=True)
    ss = jnp.sum(h * h, axis=-1, keepdims=True)
    mu = s * inv_n
    var = ss * inv_n - mu * mu
    h = (h - mu) * jax.lax.rsqrt(var + LN_EPS)
    return jnp.maximum(h * gamma + beta, 0.0)


def _dqn_kernel(x_ref,
                w1_ref, b1_ref, g1_ref, be1_ref,
                w2_ref, b2_ref, g2_ref, be2_ref,
                w3_ref, b3_ref,
                out_ref):
    # ---- fc1 (bf16 x bf16 -> f32 on MXU) + LayerNorm + ReLU ----
    h = jnp.dot(x_ref[...].astype(jnp.bfloat16), w1_ref[...],
                preferred_element_type=jnp.float32) + b1_ref[...]
    h = _layernorm_relu(h, g1_ref[...], be1_ref[...])

    # ---- fc2 + LayerNorm + ReLU ----
    h = jnp.dot(h.astype(jnp.bfloat16), w2_ref[...],
                preferred_element_type=jnp.float32) + b2_ref[...]
    h = _layernorm_relu(h, g2_ref[...], be2_ref[...])

    # ---- fc3 (lane-padded to 128 -> unmasked full-lane stores) ----
    out_ref[...] = (jnp.dot(h.astype(jnp.bfloat16), w3_ref[...],
                            preferred_element_type=jnp.float32)
                    + b3_ref[...]).astype(out_ref.dtype)


@functools.partial(jax.jit, static_argnames=("action_size", "tm"))
def dqn_forward(x, packed_params, *, action_size, tm=256):
    """x: (B, state_size) f32 -> (B, action_size) f32."""
    (w1, b1, g1, be1, w2, b2, g2, be2, w3p, b3p) = packed_params
    B, S = x.shape
    n_pad = w3p.shape[1]                            # 128 (lane-padded fc3 width)
    h1 = w1.shape[1]
    h2 = w2.shape[1]

    # Batch tiling: <=256 rows per grid step (v7x-VMEM-safe); pad B so the grid
    # divides evenly, slice the padded rows off afterwards.
    tm = min(tm, _round_up(B, 8))
    b_pad = _round_up(B, tm)
    if b_pad != B:
        x = jnp.pad(x, ((0, b_pad - B), (0, 0)))
    grid = (b_pad // tm,)

    const = lambda i: (0, 0)                        # weights resident across steps
    in_specs = [
        pl.BlockSpec((tm, S), lambda i: (i, 0)),    # x: tiled over batch
        pl.BlockSpec(w1.shape, const), pl.BlockSpec(b1.shape, const),
        pl.BlockSpec(g1.shape, const), pl.BlockSpec(be1.shape, const),
        pl.BlockSpec(w2.shape, const), pl.BlockSpec(b2.shape, const),
        pl.BlockSpec(g2.shape, const), pl.BlockSpec(be2.shape, const),
        pl.BlockSpec(w3p.shape, const), pl.BlockSpec(b3p.shape, const),
    ]
    out_specs = pl.BlockSpec((tm, n_pad), lambda i: (i, 0))

    param_bytes = sum(int(p.size) * p.dtype.itemsize for p in packed_params)
    cost = pl.CostEstimate(
        flops=2 * b_pad * (S * h1 + h1 * h2 + h2 * n_pad),
        transcendentals=2 * b_pad,                  # one rsqrt per row per LN
        bytes_accessed=param_bytes + b_pad * S * 4 + b_pad * n_pad * 4,
    )

    out = pl.pallas_call(
        _dqn_kernel,
        out_shape=jax.ShapeDtypeStruct((b_pad, n_pad), jnp.float32),
        grid=grid,
        in_specs=in_specs,
        out_specs=out_specs,
        compiler_params=pltpu.CompilerParams(
            dimension_semantics=("parallel",),
            vmem_limit_bytes=32 * 1024 * 1024,
        ),
        cost_estimate=cost,
    )(x, w1, b1, g1, be1, w2, b2, g2, be2, w3p, b3p)

    return out[:B, :action_size]


def init_params(key, state_size, action_size):
    """Deterministic PyTorch-style init (uniform +/- 1/sqrt(fan_in)), f32."""
    def linear(key, fan_in, fan_out):
        kw, kb = jax.random.split(key)
        bound = 1.0 / jnp.sqrt(fan_in)
        # stored as (in, out): transposed relative to torch's (out, in)
        w = jax.random.uniform(kw, (fan_in, fan_out), jnp.float32, -bound, bound)
        b = jax.random.uniform(kb, (1, fan_out), jnp.float32, -bound, bound)
        return w, b

    k1, k2, k3 = jax.random.split(key, 3)
    w1, b1 = linear(k1, state_size, 512)
    w2, b2 = linear(k2, 512, 256)
    w3, b3 = linear(k3, 256, action_size)
    # LayerNorm: gamma=1, beta=0 (PyTorch default)
    g1, be1 = jnp.ones((1, 512), jnp.float32), jnp.zeros((1, 512), jnp.float32)
    g2, be2 = jnp.ones((1, 256), jnp.float32), jnp.zeros((1, 256), jnp.float32)
    return (w1, b1, g1, be1, w2, b2, g2, be2, w3, b3)


def pack_params(params):
    """Kernel-ready params: bf16 weights, fc3 lane-padded to a multiple of 128."""
    (w1, b1, g1, be1, w2, b2, g2, be2, w3, b3) = params
    a = w3.shape[1]
    n_pad = _round_up(a, LANE)
    w3p = jnp.zeros((w3.shape[0], n_pad), jnp.float32).at[:, :a].set(w3)
    b3p = jnp.zeros((1, n_pad), jnp.float32).at[:, :a].set(b3)
    return (w1.astype(jnp.bfloat16), b1, g1, be1,
            w2.astype(jnp.bfloat16), b2, g2, be2,
            w3p.astype(jnp.bfloat16), b3p)


def dqn_reference(x, params):
    """Pure-JAX f32 reference (exact PyTorch semantics)."""
    (w1, b1, g1, be1, w2, b2, g2, be2, w3, b3) = params

    def ln(h, g, b):
        mu = jnp.mean(h, axis=-1, keepdims=True)
        var = jnp.mean((h - mu) ** 2, axis=-1, keepdims=True)
        return (h - mu) * jax.lax.rsqrt(var + LN_EPS) * g + b

    h = jax.nn.relu(ln(x @ w1 + b1, g1, be1))
    h = jax.nn.relu(ln(h @ w2 + b2, g2, be2))
    return h @ w3 + b3


def dqn_reference_bf16(x, params):
    """Pure-JAX reference matching the kernel's bf16-operand / f32-accumulate math."""
    (w1, b1, g1, be1, w2, b2, g2, be2, w3, b3) = params

    def mm(a, w):
        return jax.lax.dot(a.astype(jnp.bfloat16), w.astype(jnp.bfloat16),
                           preferred_element_type=jnp.float32)

    def ln(h, g, b):
        mu = jnp.mean(h, axis=-1, keepdims=True)
        var = jnp.mean(h * h, axis=-1, keepdims=True) - mu * mu
        return (h - mu) * jax.lax.rsqrt(var + LN_EPS) * g + b

    h = jax.nn.relu(ln(mm(x, w1) + b1, g1, be1))
    h = jax.nn.relu(ln(mm(h, w2) + b2, g2, be2))
    return mm(h, w3) + b3


if __name__ == "__main__":
    max_trade_share = 10
    action_space = 2 * max_trade_share + 1   # 21

    batch = 8
    state_size = 32
    action_size = action_space

    key = jax.random.PRNGKey(0)
    kx, kp = jax.random.split(key)
    x = jax.random.normal(kx, (batch, state_size), jnp.float32)
    params = init_params(kp, state_size, action_size)
    packed = pack_params(params)

    out = jax.block_until_ready(dqn_forward(x, packed, action_size=action_size))
    assert out.shape == (batch, action_size), out.shape

    ref_bf16 = dqn_reference_bf16(x, params)
    ref_f32 = dqn_reference(x, params)
    assert jnp.allclose(out, ref_bf16, atol=5e-3, rtol=5e-3), (
        float(jnp.max(jnp.abs(out - ref_bf16))))
    assert jnp.allclose(out, ref_f32, atol=5e-2, rtol=5e-2), (
        float(jnp.max(jnp.abs(out - ref_f32))))

    # Exercise the batch-grid + padding path (B not a multiple of the tile).
    x2 = jax.random.normal(jax.random.PRNGKey(1), (40, state_size), jnp.float32)
    out2 = jax.block_until_ready(
        dqn_forward(x2, packed, action_size=action_size, tm=16))
    ref2 = dqn_reference_bf16(x2, params)
    assert out2.shape == (40, action_size), out2.shape
    assert jnp.allclose(out2, ref2, atol=5e-3, rtol=5e-3), (
        float(jnp.max(jnp.abs(out2 - ref2))))

    # TODO(synk): sample_action's epsilon-greedy host RNG / argmax stays outside
    # the kernel (host-side control flow, not a Pallas op).
    print("KERNEL_OK")
</pallas_src>

<mosaic_0001>
module attributes {stable_mosaic.version = 11 : i64} {
  func.func @_dqn_kernel(%arg0: i32, %arg1: memref<8x32xf32, #tpu.memory_space<vmem>>, %arg2: memref<32x512xbf16, #tpu.memory_space<vmem>>, %arg3: memref<1x512xf32, #tpu.memory_space<vmem>>, %arg4: memref<1x512xf32, #tpu.memory_space<vmem>>, %arg5: memref<1x512xf32, #tpu.memory_space<vmem>>, %arg6: memref<512x256xbf16, #tpu.memory_space<vmem>>, %arg7: memref<1x256xf32, #tpu.memory_space<vmem>>, %arg8: memref<1x256xf32, #tpu.memory_space<vmem>>, %arg9: memref<1x256xf32, #tpu.memory_space<vmem>>, %arg10: memref<256x128xbf16, #tpu.memory_space<vmem>>, %arg11: memref<1x128xf32, #tpu.memory_space<vmem>>, %arg12: memref<8x128xf32, #tpu.memory_space<vmem>>) attributes {dimension_semantics = [#tpu.dimension_semantics<parallel>], iteration_bounds = array<i64: 1>, scalar_prefetch = 0 : i64, scratch_operands = 0 : i64, tpu.core_type = #tpu.core_type<tc>, window_params = [{transform_indices = @transform_0, window_bounds = array<i64: 8, 32>}, {pipeline_mode = #tpu.pipeline_mode<synchronous>, transform_indices = @transform_1, window_bounds = array<i64: 32, 512>}, {pipeline_mode = #tpu.pipeline_mode<synchronous>, transform_indices = @transform_2, window_bounds = array<i64: 1, 512>}, {pipeline_mode = #tpu.pipeline_mode<synchronous>, transform_indices = @transform_3, window_bounds = array<i64: 1, 512>}, {pipeline_mode = #tpu.pipeline_mode<synchronous>, transform_indices = @transform_4, window_bounds = array<i64: 1, 512>}, {pipeline_mode = #tpu.pipeline_mode<synchronous>, transform_indices = @transform_5, window_bounds = array<i64: 512, 256>}, {pipeline_mode = #tpu.pipeline_mode<synchronous>, transform_indices = @transform_6, window_bounds = array<i64: 1, 256>}, {pipeline_mode = #tpu.pipeline_mode<synchronous>, transform_indices = @transform_7, window_bounds = array<i64: 1, 256>}, {pipeline_mode = #tpu.pipeline_mode<synchronous>, transform_indices = @transform_8, window_bounds = array<i64: 1, 256>}, {pipeline_mode = #tpu.pipeline_mode<synchronous>, transform_indices = @transform_9, window_bounds = array<i64: 256, 128>}, {pipeline_mode = #tpu.pipeline_mode<synchronous>, transform_indices = @transform_10, window_bounds = array<i64: 1, 128>}, {transform_indices = @transform_11, window_bounds = array<i64: 8, 128>}]} {
    %c0 = arith.constant 0 : index
    %c0_0 = arith.constant 0 : index
    %0 = vector.load %arg1[%c0, %c0_0] : memref<8x32xf32, #tpu.memory_space<vmem>>, vector<8x32xf32>
    %1 = arith.truncf %0 : vector<8x32xf32> to vector<8x32xbf16>
    %c0_1 = arith.constant 0 : index
    %c0_2 = arith.constant 0 : index
    %2 = vector.load %arg2[%c0_1, %c0_2] : memref<32x512xbf16, #tpu.memory_space<vmem>>, vector<32x512xbf16>
    %cst = arith.constant dense<0.000000e+00> : vector<8x512xf32>
    %3 = tpu.matmul %1, %2, %cst {dimension_numbers = #tpu.dot_dimension_numbers<[1], [0], [0], [1], [0, 0, 1, 1], [], []>} : vector<8x32xbf16>, vector<32x512xbf16>, vector<8x512xf32> -> vector<8x512xf32>
    %c0_3 = arith.constant 0 : index
    %c0_4 = arith.constant 0 : index
    %4 = vector.load %arg3[%c0_3, %c0_4] : memref<1x512xf32, #tpu.memory_space<vmem>>, vector<1x512xf32>
    %5 = vector.broadcast %4 : vector<1x512xf32> to vector<8x512xf32>
    %6 = arith.addf %3, %5 : vector<8x512xf32>
    %c0_5 = arith.constant 0 : index
    %c0_6 = arith.constant 0 : index
    %7 = vector.load %arg4[%c0_5, %c0_6] : memref<1x512xf32, #tpu.memory_space<vmem>>, vector<1x512xf32>
    %c0_7 = arith.constant 0 : index
    %c0_8 = arith.constant 0 : index
    %8 = vector.load %arg5[%c0_7, %c0_8] : memref<1x512xf32, #tpu.memory_space<vmem>>, vector<1x512xf32>
    %cst_9 = arith.constant dense<0.000000e+00> : vector<8xf32>
    %9 = vector.multi_reduction <add>, %6, %cst_9 [1] : vector<8x512xf32> to vector<8xf32>
    %10 = vector.shape_cast %9 : vector<8xf32> to vector<8x1xf32>
    %11 = arith.mulf %6, %6 : vector<8x512xf32>
    %cst_10 = arith.constant dense<0.000000e+00> : vector<8xf32>
    %12 = vector.multi_reduction <add>, %11, %cst_10 [1] : vector<8x512xf32> to vector<8xf32>
    %13 = vector.shape_cast %12 : vector<8xf32> to vector<8x1xf32>
    %cst_11 = arith.constant 0.001953125 : f32
    %14 = vector.broadcast %cst_11 : f32 to vector<8x1xf32>
    %15 = arith.mulf %10, %14 : vector<8x1xf32>
    %cst_12 = arith.constant 0.001953125 : f32
    %16 = vector.broadcast %cst_12 : f32 to vector<8x1xf32>
    %17 = arith.mulf %13, %16 : vector<8x1xf32>
    %18 = arith.mulf %15, %15 : vector<8x1xf32>
    %19 = arith.subf %17, %18 : vector<8x1xf32>
    %20 = vector.broadcast %15 : vector<8x1xf32> to vector<8x512xf32>
    %21 = arith.subf %6, %20 : vector<8x512xf32>
    %cst_13 = arith.constant 9.99999974E-6 : f32
    %22 = vector.broadcast %cst_13 : f32 to vector<8x1xf32>
    %23 = arith.addf %19, %22 : vector<8x1xf32>
    %24 = math.rsqrt %23 : vector<8x1xf32>
    %25 = vector.broadcast %24 : vector<8x1xf32> to vector<8x512xf32>
    %26 = arith.mulf %21, %25 : vector<8x512xf32>
    %27 = vector.broadcast %7 : vector<1x512xf32> to vector<8x512xf32>
    %28 = arith.mulf %26, %27 : vector<8x512xf32>
    %29 = vector.broadcast %8 : vector<1x512xf32> to vector<8x512xf32>
    %30 = arith.addf %28, %29 : vector<8x512xf32>
    %cst_14 = arith.constant 0.000000e+00 : f32
    %31 = vector.broadcast %cst_14 : f32 to vector<8x512xf32>
    %32 = arith.maximumf %30, %31 : vector<8x512xf32>
    %33 = arith.truncf %32 : vector<8x512xf32> to vector<8x512xbf16>
    %c0_15 = arith.constant 0 : index
    %c0_16 = arith.constant 0 : index
    %34 = vector.load %arg6[%c0_15, %c0_16] : memref<512x256xbf16, #tpu.memory_space<vmem>>, vector<512x256xbf16>
    %cst_17 = arith.constant dense<0.000000e+00> : vector<8x256xf32>
    %35 = tpu.matmul %33, %34, %cst_17 {dimension_numbers = #tpu.dot_dimension_numbers<[1], [0], [0], [1], [0, 0, 1, 1], [], []>} : vector<8x512xbf16>, vector<512x256xbf16>, vector<8x256xf32> -> vector<8x256xf32>
    %c0_18 = arith.constant 0 : index
    %c0_19 = arith.constant 0 : index
    %36 = vector.load %arg7[%c0_18, %c0_19] : memref<1x256xf32, #tpu.memory_space<vmem>>, vector<1x256xf32>
    %37 = vector.broadcast %36 : vector<1x256xf32> to vector<8x256xf32>
    %38 = arith.addf %35, %37 : vector<8x256xf32>
    %c0_20 = arith.constant 0 : index
    %c0_21 = arith.constant 0 : index
    %39 = vector.load %arg8[%c0_20, %c0_21] : memref<1x256xf32, #tpu.memory_space<vmem>>, vector<1x256xf32>
    %c0_22 = arith.constant 0 : index
    %c0_23 = arith.constant 0 : index
    %40 = vector.load %arg9[%c0_22, %c0_23] : memref<1x256xf32, #tpu.memory_space<vmem>>, vector<1x256xf32>
    %cst_24 = arith.constant dense<0.000000e+00> : vector<8xf32>
    %41 = vector.multi_reduction <add>, %38, %cst_24 [1] : vector<8x256xf32> to vector<8xf32>
    %42 = vector.shape_cast %41 : vector<8xf32> to vector<8x1xf32>
    %43 = arith.mulf %38, %38 : vector<8x256xf32>
    %cst_25 = arith.constant dense<0.000000e+00> : vector<8xf32>
    %44 = vector.multi_reduction <add>, %43, %cst_25 [1] : vector<8x256xf32> to vector<8xf32>
    %45 = vector.shape_cast %44 : vector<8xf32> to vector<8x1xf32>
    %cst_26 = arith.constant 3.906250e-03 : f32
    %46 = vector.broadcast %cst_26 : f32 to vector<8x1xf32>
    %47 = arith.mulf %42, %46 : vector<8x1xf32>
    %cst_27 = arith.constant 3.906250e-03 : f32
    %48 = vector.broadcast %cst_27 : f32 to vector<8x1xf32>
    %49 = arith.mulf %45, %48 : vector<8x1xf32>
    %50 = arith.mulf %47, %47 : vector<8x1xf32>
    %51 = arith.subf %49, %50 : vector<8x1xf32>
    %52 = vector.broadcast %47 : vector<8x1xf32> to vector<8x256xf32>
    %53 = arith.subf %38, %52 : vector<8x256xf32>
    %cst_28 = arith.constant 9.99999974E-6 : f32
    %54 = vector.broadcast %cst_28 : f32 to vector<8x1xf32>
    %55 = arith.addf %51, %54 : vector<8x1xf32>
    %56 = math.rsqrt %55 : vector<8x1xf32>
    %57 = vector.broadcast %56 : vector<8x1xf32> to vector<8x256xf32>
    %58 = arith.mulf %53, %57 : vector<8x256xf32>
    %59 = vector.broadcast %39 : vector<1x256xf32> to vector<8x256xf32>
    %60 = arith.mulf %58, %59 : vector<8x256xf32>
    %61 = vector.broadcast %40 : vector<1x256xf32> to vector<8x256xf32>
    %62 = arith.addf %60, %61 : vector<8x256xf32>
    %cst_29 = arith.constant 0.000000e+00 : f32
    %63 = vector.broadcast %cst_29 : f32 to vector<8x256xf32>
    %64 = arith.maximumf %62, %63 : vector<8x256xf32>
    %65 = arith.truncf %64 : vector<8x256xf32> to vector<8x256xbf16>
    %c0_30 = arith.constant 0 : index
    %c0_31 = arith.constant 0 : index
    %66 = vector.load %arg10[%c0_30, %c0_31] : memref<256x128xbf16, #tpu.memory_space<vmem>>, vector<256x128xbf16>
    %cst_32 = arith.constant dense<0.000000e+00> : vector<8x128xf32>
    %67 = tpu.matmul %65, %66, %cst_32 {dimension_numbers = #tpu.dot_dimension_numbers<[1], [0], [0], [1], [0, 0, 1, 1], [], []>} : vector<8x256xbf16>, vector<256x128xbf16>, vector<8x128xf32> -> vector<8x128xf32>
    %c0_33 = arith.constant 0 : index
    %c0_34 = arith.constant 0 : index
    %68 = vector.load %arg11[%c0_33, %c0_34] : memref<1x128xf32, #tpu.memory_space<vmem>>, vector<1x128xf32>
    %69 = vector.broadcast %68 : vector<1x128xf32> to vector<8x128xf32>
    %70 = arith.addf %67, %69 : vector<8x128xf32>
    %c0_35 = arith.constant 0 : index
    %c0_36 = arith.constant 0 : index
    %71 = vector.load %arg12[%c0_35, %c0_36] : memref<8x128xf32, #tpu.memory_space<vmem>>, vector<8x128xf32>
    tpu.vector_store %arg12[%c0_35, %c0_36], %70 {strides = array<i32>} : memref<8x128xf32, #tpu.memory_space<vmem>>, vector<8x128xf32>,
    return
  }
  func.func @transform_0(%arg0: i32) -> (i32, i32) {
    %c0_i32 = arith.constant 0 : i32
    %c0_i32_0 = arith.constant 0 : i32
    return %arg0, %c0_i32 : i32, i32
  }
  func.func @transform_1(%arg0: i32) -> (i32, i32) {
    %c0_i32 = arith.constant 0 : i32
    %c0_i32_0 = arith.constant 0 : i32
    %c0_i32_1 = arith.constant 0 : i32
    return %c0_i32, %c0_i32_0 : i32, i32
  }
  func.func @transform_2(%arg0: i32) -> (i32, i32) {
    %c0_i32 = arith.constant 0 : i32
    %c0_i32_0 = arith.constant 0 : i32
    %c0_i32_1 = arith.constant 0 : i32
    return %c0_i32, %c0_i32_0 : i32, i32
  }
  func.func @transform_3(%arg0: i32) -> (i32, i32) {
    %c0_i32 = arith.constant 0 : i32
    %c0_i32_0 = arith.constant 0 : i32
    %c0_i32_1 = arith.constant 0 : i32
    return %c0_i32, %c0_i32_0 : i32, i32
  }
  func.func @transform_4(%arg0: i32) -> (i32, i32) {
    %c0_i32 = arith.constant 0 : i32
    %c0_i32_0 = arith.constant 0 : i32
    %c0_i32_1 = arith.constant 0 : i32
    return %c0_i32, %c0_i32_0 : i32, i32
  }
  func.func @transform_5(%arg0: i32) -> (i32, i32) {
    %c0_i32 = arith.constant 0 : i32
    %c0_i32_0 = arith.constant 0 : i32
    %c0_i32_1 = arith.constant 0 : i32
    return %c0_i32, %c0_i32_0 : i32, i32
  }
  func.func @transform_6(%arg0: i32) -> (i32, i32) {
    %c0_i32 = arith.constant 0 : i32
    %c0_i32_0 = arith.constant 0 : i32
    %c0_i32_1 = arith.constant 0 : i32
    return %c0_i32, %c0_i32_0 : i32, i32
  }
  func.func @transform_7(%arg0: i32) -> (i32, i32) {
    %c0_i32 = arith.constant 0 : i32
    %c0_i32_0 = arith.constant 0 : i32
    %c0_i32_1 = arith.constant 0 : i32
    return %c0_i32, %c0_i32_0 : i32, i32
  }
  func.func @transform_8(%arg0: i32) -> (i32, i32) {
    %c0_i32 = arith.constant 0 : i32
    %c0_i32_0 = arith.constant 0 : i32
    %c0_i32_1 = arith.constant 0 : i32
    return %c0_i32, %c0_i32_0 : i32, i32
  }
  func.func @transform_9(%arg0: i32) -> (i32, i32) {
    %c0_i32 = arith.constant 0 : i32
    %c0_i32_0 = arith.constant 0 : i32
    %c0_i32_1 = arith.constant 0 : i32
    return %c0_i32, %c0_i32_0 : i32, i32
  }
  func.func @transform_10(%arg0: i32) -> (i32, i32) {
    %c0_i32 = arith.constant 0 : i32
    %c0_i32_0 = arith.constant 0 : i32
    %c0_i32_1 = arith.constant 0 : i32
    return %c0_i32, %c0_i32_0 : i32, i32
  }
  func.func @transform_11(%arg0: i32) -> (i32, i32) {
    %c0_i32 = arith.constant 0 : i32
    %c0_i32_0 = arith.constant 0 : i32
    return %arg0, %c0_i32 : i32, i32
  }
}

</mosaic_0001>

<llo_original>
// kernel: dqn_forward.1
$region0: #{dqn_forward.1}
  #allocation0 [shape = 'u32[]', space=smem, size = 0x4, offset = 0x4, fixed_abs, tag = 'smem constant byte address 0x4 - core index']
  #allocation1 [shape = 'u32[144,128]{1,0:T(1,128)}', space=vmem, size = 0x12000, scoped, tag = 'internal scratch']
  %s0 = inlined_call_operand.hbm [shape: f32[8,32], index: 0, kind: input, shape index: {}]
  %s1 = inlined_call_operand.hbm [shape: bf16[32,512], index: 1, kind: input, shape index: {}]
  %s2 = inlined_call_operand.vmem [shape: f32[1,512], index: 2, kind: input, shape index: {}]
  %s3 = inlined_call_operand.vmem [shape: f32[1,512], index: 3, kind: input, shape index: {}]
  %s4 = inlined_call_operand.vmem [shape: f32[1,512], index: 4, kind: input, shape index: {}]
  %s5 = inlined_call_operand.hbm [shape: bf16[512,256], index: 5, kind: input, shape index: {}]
  %s6 = inlined_call_operand.vmem [shape: f32[1,256], index: 6, kind: input, shape index: {}]
  %s7 = inlined_call_operand.vmem [shape: f32[1,256], index: 7, kind: input, shape index: {}]
  %s8 = inlined_call_operand.vmem [shape: f32[1,256], index: 8, kind: input, shape index: {}]
  %s9 = inlined_call_operand.hbm [shape: bf16[256,128], index: 9, kind: input, shape index: {}]
  %s10 = inlined_call_operand.vmem [shape: f32[1,128], index: 10, kind: input, shape index: {}]
  %s11 = inlined_call_operand.hbm [shape: f32[8,128], index: 11, kind: output, shape index: {}]
  %s12 = sld [smem:[#allocation0]]
  $region70: #{dqn_forward.1} parent=0
    _
  %s14 = ssub.s32 1, %s12
  %s15 = scalar_select 0, %s14, %s12
  $region1: #{dqn_forward.1} parent=0
    #allocation2 [shape = 'u8[4096]{0}', space=vmem, size = 0x1000, scoped, tag = 'input window, operand 0, single buffered']
    #allocation3 [shape = 's32[1]{0}', space=sflag, size = 0x4, scoped, tag = 'scoped memory for dqn_forward.1']
    #allocation4 [shape = 's32[1]{0}', space=sflag, size = 0x4, scoped, tag = 'scoped memory for dqn_forward.1']
    #allocation5 [shape = 'u8[32768]{0}', space=vmem, size = 0x8000, scoped, tag = 'input window, operand 1, single buffered']
    #allocation6 [shape = 's32[1]{0}', space=sflag, size = 0x4, scoped, tag = 'scoped memory for dqn_forward.1']
    #allocation7 [shape = 'u8[262144]{0}', space=vmem, size = 0x40000, scoped, tag = 'input window, operand 5, single buffered']
    #allocation8 [shape = 'u8[65536]{0}', space=vmem, size = 0x10000, scoped, tag = 'input window, operand 9, single buffered']
    #allocation9 [shape = 's32[1]{0}', space=sflag, size = 0x4, scoped, tag = 'scoped memory for dqn_forward.1']
    #allocation10 [shape = 'u8[4096]{0}', space=vmem, size = 0x1000, scoped, tag = 'output window, operand 0, single buffered']
    %16 = vsyncpa [#allocation3], 0
    %17 = vsyncpa [#allocation6], 0
    %18 = vsyncpa [#allocation9], 0
    %19 = vsyncpa [#allocation4], 0
    // Predicated region
    $region2: #{dqn_forward.1} parent=1 // pred_check
      _
    $region3: #{dqn_forward.1} parent=1 // pred_check_branch
      %21 = sbr.rel (0) target = $region5
    $region4: #{dqn_forward.1} parent=1 // pred_region
      %s23 = ssub.s32 128, 128
      %24 = vsyncadd [#allocation3], %s23
      %s26 = sshll.u32 [#allocation2], 4
      %s27 = int_to_ptr.vmem [resolvable:$true] %s26
      %29 = dma.hbm_to_vmem [thread:$0]  %s0, 128, %s27, [#allocation3]
    $region5: #{dqn_forward.1} parent=1 // pred_fallthru
      _
    // Predicated region
    $region6: #{dqn_forward.1} parent=1 // pred_check
      _
    $region7: #{dqn_forward.1} parent=1 // pred_check_branch
      %31 = sbr.rel (0) target = $region9
    $region8: #{dqn_forward.1} parent=1 // pred_region
      %s33 = ssub.s32 1024, 1024
      %34 = vsyncadd [#allocation6], %s33
      %s35 = sshll.u32 [#allocation5], 4
      %s36 = int_to_ptr.vmem [resolvable:$true] %s35
      %41 = dma.hbm_to_vmem [thread:$0]  %s1, 1024, %s36, [#allocation6], 256, 256, 16
    $region9: #{dqn_forward.1} parent=1 // pred_fallthru
      _
    // Predicated region
    $region10: #{dqn_forward.1} parent=1 // pred_check
      _
    $region11: #{dqn_forward.1} parent=1 // pred_check_branch
      %43 = sbr.rel (0) target = $region13
    $region12: #{dqn_forward.1} parent=1 // pred_region
      _
    $region13: #{dqn_forward.1} parent=1 // pred_fallthru
      _
    // Predicated region
    $region14: #{dqn_forward.1} parent=1 // pred_check
      _
    $region15: #{dqn_forward.1} parent=1 // pred_check_branch
      %45 = sbr.rel (0) target = $region17
    $region16: #{dqn_forward.1} parent=1 // pred_region
      _
    $region17: #{dqn_forward.1} parent=1 // pred_fallthru
      _
    // Predicated region
    $region18: #{dqn_forward.1} parent=1 // pred_check
      _
    $region19: #{dqn_forward.1} parent=1 // pred_check_branch
      %47 = sbr.rel (0) target = $region21
    $region20: #{dqn_forward.1} parent=1 // pred_region
      _
    $region21: #{dqn_forward.1} parent=1 // pred_fallthru
      _
    // Predicated region
    $region22: #{dqn_forward.1} parent=1 // pred_check
      _
    $region23: #{dqn_forward.1} parent=1 // pred_check_branch
      %49 = sbr.rel (0) target = $region25
    $region24: #{dqn_forward.1} parent=1 // pred_region
      %s51 = ssub.s32 8192, 8192
      %52 = vsyncadd [#allocation6], %s51
      %s53 = sshll.u32 [#allocation7], 4
      %s54 = int_to_ptr.vmem [resolvable:$true] %s53
      %59 = dma.hbm_to_vmem [thread:$0]  %s5, 8192, %s54, [#allocation6], 128, 128, 8
    $region25: #{dqn_forward.1} parent=1 // pred_fallthru
      _
    // Predicated region
    $region26: #{dqn_forward.1} parent=1 // pred_check
      _
    $region27: #{dqn_forward.1} parent=1 // pred_check_branch
      %61 = sbr.rel (0) target = $region29
    $region28: #{dqn_forward.1} parent=1 // pred_region
      _
    $region29: #{dqn_forward.1} parent=1 // pred_fallthru
      _
    // Predicated region
    $region30: #{dqn_forward.1} parent=1 // pred_check
      _
    $region31: #{dqn_forward.1} parent=1 // pred_check_branch
      %63 = sbr.rel (0) target = $region33
    $region32: #{dqn_forward.1} parent=1 // pred_region
      _
    $region33: #{dqn_forward.1} parent=1 // pred_fallthru
      _
    // Predicated region
    $region34: #{dqn_forward.1} parent=1 // pred_check
      _
    $region35: #{dqn_forward.1} parent=1 // pred_check_branch
      %65 = sbr.rel (0) target = $region37
    $region36: #{dqn_forward.1} parent=1 // pred_region
      _
    $region37: #{dqn_forward.1} parent=1 // pred_fallthru
      _
    // Predicated region
    $region38: #{dqn_forward.1} parent=1 // pred_check
      _
    $region39: #{dqn_forward.1} parent=1 // pred_check_branch
      %67 = sbr.rel (0) target = $region41
    $region40: #{dqn_forward.1} parent=1 // pred_region
      %s69 = ssub.s32 2048, 2048
      %70 = vsyncadd [#allocation9], %s69
      %s71 = sshll.u32 [#allocation8], 4
      %s72 = int_to_ptr.vmem [resolvable:$true] %s71
      %77 = dma.hbm_to_vmem [thread:$0]  %s9, 2048, %s72, [#allocation9], 64, 64, 4
    $region41: #{dqn_forward.1} parent=1 // pred_fallthru
      _
    // Predicated region
    $region42: #{dqn_forward.1} parent=1 // pred_check
      _
    $region43: #{dqn_forward.1} parent=1 // pred_check_branch
      %79 = sbr.rel (0) target = $region45
    $region44: #{dqn_forward.1} parent=1 // pred_region
      _
    $region45: #{dqn_forward.1} parent=1 // pred_fallthru
      _
    // Predicated region
    $region46: #{dqn_forward.1} parent=1 // pred_check
      _
    $region47: #{dqn_forward.1} parent=1 // pred_check_branch
      %81 = sbr.rel (0) target = $region49
    $region48: #{dqn_forward.1} parent=1 // pred_region
      %82 = dma.done [#allocation3], 128
    $region49: #{dqn_forward.1} parent=1 // pred_fallthru
      _
    // Predicated region
    $region50: #{dqn_forward.1} parent=1 // pred_check
      _
    $region51: #{dqn_forward.1} parent=1 // pred_check_branch
      %84 = sbr.rel (0) target = $region53
    $region52: #{dqn_forward.1} parent=1 // pred_region
      %85 = dma.done [#allocation6], 1024
    $region53: #{dqn_forward.1} parent=1 // pred_fallthru
      _
    // Predicated region
    $region54: #{dqn_forward.1} parent=1 // pred_check
      _
    $region55: #{dqn_forward.1} parent=1 // pred_check_branch
      %87 = sbr.rel (0) target = $region57
    $region56: #{dqn_forward.1} parent=1 // pred_region
      %88 = dma.done [#allocation6], 8192
    $region57: #{dqn_forward.1} parent=1 // pred_fallthru
      _
    // Predicated region
    $region58: #{dqn_forward.1} parent=1 // pred_check
      _
    $region59: #{dqn_forward.1} parent=1 // pred_check_branch
      %90 = sbr.rel (0) target = $region61
    $region60: #{dqn_forward.1} parent=1 // pred_region
      %91 = dma.done [#allocation9], 2048
    $region61: #{dqn_forward.1} parent=1 // pred_fallthru
      _
    %v93 = vld [vmem:[#allocation2] sm:$0xff]
    %v94 = vpack.c.bf16 %v93, %v93
    %v95 = vld [vmem:[#allocation5] sm:$0xff]
    %v96 = vld [vmem:[#allocation5 + $0x8] sm:$0xff]
    %v97 = vld [vmem:[#allocation5 + $0x10] sm:$0xff]
    %v98 = vld [vmem:[#allocation5 + $0x18] sm:$0xff]
    %v99 = vld [vmem:[#allocation5 + $0x20] sm:$0xff]
    %v100 = vld [vmem:[#allocation5 + $0x28] sm:$0xff]
    %v101 = vld [vmem:[#allocation5 + $0x30] sm:$0xff]
    %v102 = vld [vmem:[#allocation5 + $0x38] sm:$0xff]
    %v103 = vld [vmem:[%s2] sm:$0xf]
    %v105 = vlaneseq
    %v106 = vshrl.u32 %v105, 7
    %v107 = vsub.s32 0, %v106
    %v108 = vrot.slane %v103, %v107
    %v109 = vlaneseq
    %v110 = vshrl.u32 %v109, 7
    %v111 = vsub.s32 1, %v110
    %v112 = vrot.slane %v103, %v111
    %v113 = vlaneseq
    %v114 = vshrl.u32 %v113, 7
    %v115 = vsub.s32 2, %v114
    %v116 = vrot.slane %v103, %v115
    %v117 = vlaneseq
    %v118 = vshrl.u32 %v117, 7
    %v119 = vsub.s32 3, %v118
    %v120 = vrot.slane %v103, %v119
    %v133 = vunpack.c.l.b16 %v95
    %v134 = vunpack.c.h.b16 %v95
    %v135 = vunpack.c.l.b16 %v96
    %v136 = vunpack.c.h.b16 %v96
    %v137 = vunpack.c.l.b16 %v97
    %v138 = vunpack.c.h.b16 %v97
    %v139 = vunpack.c.l.b16 %v98
    %v140 = vunpack.c.h.b16 %v98
    %v141 = vunpack.c.l.b16 %v99
    %v142 = vunpack.c.h.b16 %v99
    %v143 = vunpack.c.l.b16 %v100
    %v144 = vunpack.c.h.b16 %v100
    %v145 = vunpack.c.l.b16 %v101
    %v146 = vunpack.c.h.b16 %v101
    %v147 = vunpack.c.l.b16 %v102
    %v148 = vunpack.c.h.b16 %v102
    %v149 = vpack.c.b16 %v137, %v133
    %v150 = vpack.c.b16 %v138, %v134
    %v151 = vpack.c.b16 %v139, %v135
    %v152 = vpack.c.b16 %v140, %v136
    %v153 = vpack.c.b16 %v145, %v141
    %v154 = vpack.c.b16 %v146, %v142
    %v155 = vpack.c.b16 %v147, %v143
    %v156 = vpack.c.b16 %v148, %v144
    %vm165 = vcmask 261120
    %v167 = vsel %vm165, %v94, 0
    %169 = vmatprep.subr.bf16.mxu0 %v150
    %170 = vmatpush1.bf16.msra.mxu0 %v149
    %171 = vmatprep.subr.bf16.mxu0 %v154
    %172 = vmatpush1.bf16.msra.mxu0 %v153
    %173 = vmatprep.subr.bf16.mxu0 0
    %174 = vmatpush1.bf16.msra.mxu0 0
    %175 = vmatprep.subr.bf16.mxu0 0
    %176 = vmatpush1.bf16.msra.mxu0 0
    %177 = vmatprep.subr.bf16.mxu0 0
    %178 = vmatpush1.bf16.msra.mxu0 0
    %179 = vmatprep.subr.bf16.mxu0 0
    %180 = vmatpush1.bf16.msra.mxu0 0
    %181 = vmatprep.subr.bf16.mxu0 0
    %182 = vmatpush1.bf16.msra.mxu0 0
    %183 = vmatprep.subr.bf16.mxu0 0
    %184 = vmatpush1.bf16.msra.mxu0 0
    %185 = vmatprep.subr.bf16.mxu0 0
    %186 = vmatpush1.bf16.msra.mxu0 0
    %187 = vmatprep.subr.bf16.mxu0 0
    %188 = vmatpush1.bf16.msra.mxu0 0
    %189 = vmatprep.subr.bf16.mxu0 0
    %190 = vmatpush1.bf16.msra.mxu0 0
    %191 = vmatprep.subr.bf16.mxu0 0
    %192 = vmatpush1.bf16.msra.mxu0 0
    %193 = vmatprep.subr.bf16.mxu0 0
    %194 = vmatpush1.bf16.msra.mxu0 0
    %195 = vmatprep.subr.bf16.mxu0 0
    %196 = vmatpush1.bf16.msra.mxu0 0
    %197 = vmatprep.subr.bf16.mxu0 0
    %198 = vmatpush1.bf16.msra.mxu0 0
    %199 = vmatprep.subr.bf16.mxu0 0
    %200 = vmatpush1.bf16.msra.mxu0 0
    %201 = vmatprep.mubr.bf16.mxu0 0
    %202 = vmatmul.mubr.bf16.gmra.mrb[0].mxu0 %v167
    %v203 = vpop.f32.mrb[0].mxu0
    %v204 = vadd.f32 %v108, %v203
    %v205 = vpop.f32.mrb[0].mxu0
    %v206 = vadd.f32 %v112, %v205
    %v207 = vpop.f32.mrb[0].mxu0
    %v208 = vpop.f32.mrb[0].mxu0
    %209 = vdwg.mxu0
    %210 = vmatprep.subr.bf16.mxu0 %v152
    %211 = vmatpush1.bf16.msra.mxu0 %v151
    %212 = vmatprep.subr.bf16.mxu0 %v156
    %213 = vmatpush1.bf16.msra.mxu0 %v155
    %214 = vmatprep.subr.bf16.mxu0 0
    %215 = vmatpush1.bf16.msra.mxu0 0
    %216 = vmatprep.subr.bf16.mxu0 0
    %217 = vmatpush1.bf16.msra.mxu0 0
    %218 = vmatprep.subr.bf16.mxu0 0
    %219 = vmatpush1.bf16.msra.mxu0 0
    %220 = vmatprep.subr.bf16.mxu0 0
    %221 = vmatpush1.bf16.msra.mxu0 0
    %222 = vmatprep.subr.bf16.mxu0 0
    %223 = vmatpush1.bf16.msra.mxu0 0
    %224 = vmatprep.subr.bf16.mxu0 0
    %225 = vmatpush1.bf16.msra.mxu0 0
    %226 = vmatprep.subr.bf16.mxu0 0
    %227 = vmatpush1.bf16.msra.mxu0 0
    %228 = vmatprep.subr.bf16.mxu0 0
    %229 = vmatpush1.bf16.msra.mxu0 0
    %230 = vmatprep.subr.bf16.mxu0 0
    %231 = vmatpush1.bf16.msra.mxu0 0
    %232 = vmatprep.subr.bf16.mxu0 0
    %233 = vmatpush1.bf16.msra.mxu0 0
    %234 = vmatprep.subr.bf16.mxu0 0
    %235 = vmatpush1.bf16.msra.mxu0 0
    %236 = vmatprep.subr.bf16.mxu0 0
    %237 = vmatpush1.bf16.msra.mxu0 0
    %238 = vmatprep.subr.bf16.mxu0 0
    %239 = vmatpush1.bf16.msra.mxu0 0
    %240 = vmatprep.subr.bf16.mxu0 0
    %241 = vmatpush1.bf16.msra.mxu0 0
    %242 = vmatprep.mubr.bf16.mxu0 0
    %243 = vmatmul.mubr.bf16.gmra.mrb[0].mxu0 %v167
    %v244 = vpop.f32.mrb[0].mxu0
    %v245 = vadd.f32 %v116, %v244
    %v246 = vpop.f32.mrb[0].mxu0
    %v247 = vadd.f32 %v120, %v246
    %v248 = vpop.f32.mrb[0].mxu0
    %v249 = vpop.f32.mrb[0].mxu0
    %250 = vdwg.mxu0
    %v251 = vld [vmem:[%s3] sm:$0xf]
    %v252 = vld [vmem:[%s4] sm:$0xf]
    %v253 = vadd.f32 %v204, %v206
    %v254 = vadd.f32 %v253, %v245
    %v255 = vadd.f32 %v254, %v247
    %256 = vadd.xlane.f32.xlu0 %v255
    %v257 = vpop.xlane.xlu0 %256
    %v258 = vmul.f32 %v204, %v204
    %v259 = vmul.f32 %v206, %v206
    %v260 = vmul.f32 %v245, %v245
    %v261 = vmul.f32 %v247, %v247
    %v262 = vadd.f32 %v258, %v259
    %v263 = vadd.f32 %v262, %v260
    %v264 = vadd.f32 %v263, %v261
    %265 = vadd.xlane.f32.xlu0 %v264
    %v266 = vpop.xlane.xlu0 %265
    %v267 = vmul.f32 %v257, 0.001953125
    %v268 = vmul.f32 %v266, 0.001953125
    %v269 = vmul.f32 %v267, %v267
    %v270 = vsub.f32 %v268, %v269
    %v271 = vsub.f32 %v204, %v267
    %v272 = vsub.f32 %v206, %v267
    %v273 = vsub.f32 %v245, %v267
    %v274 = vsub.f32 %v247, %v267
    %v275 = vadd.f32 %v270, 1e-05
    %v276 = vrsqrt.pop %v275
    %v277 = vmul.f32 %v271, %v276
    %v278 = vmul.f32 %v272, %v276
    %v279 = vmul.f32 %v273, %v276
    %v280 = vmul.f32 %v274, %v276
    %v282 = vlaneseq
    %v283 = vshrl.u32 %v282, 7
    %v284 = vsub.s32 0, %v283
    %v285 = vrot.slane %v251, %v284
    %v286 = vlaneseq
    %v287 = vshrl.u32 %v286, 7
    %v288 = vsub.s32 1, %v287
    %v289 = vrot.slane %v251, %v288
    %v290 = vlaneseq
    %v291 = vshrl.u32 %v290, 7
    %v292 = vsub.s32 2, %v291
    %v293 = vrot.slane %v251, %v292
    %v294 = vlaneseq
    %v295 = vshrl.u32 %v294, 7
    %v296 = vsub.s32 3, %v295
    %v297 = vrot.slane %v251, %v296
    %v302 = vmul.f32 %v277, %v285
    %v303 = vmul.f32 %v278, %v289
    %v304 = vmul.f32 %v279, %v293
    %v305 = vmul.f32 %v280, %v297
    %v307 = vlaneseq
    %v308 = vshrl.u32 %v307, 7
    %v309 = vsub.s32 0, %v308
    %v310 = vrot.slane %v252, %v309
    %v311 = vlaneseq
    %v312 = vshrl.u32 %v311, 7
    %v313 = vsub.s32 1, %v312
    %v314 = vrot.slane %v252, %v313
    %v315 = vlaneseq
    %v316 = vshrl.u32 %v315, 7
    %v317 = vsub.s32 2, %v316
    %v318 = vrot.slane %v252, %v317
    %v319 = vlaneseq
    %v320 = vshrl.u32 %v319, 7
    %v321 = vsub.s32 3, %v320
    %v322 = vrot.slane %v252, %v321
    %v327 = vadd.f32 %v302, %v310
    %v328 = vadd.f32 %v303, %v314
    %v329 = vadd.f32 %v304, %v318
    %v330 = vadd.f32 %v305, %v322
    %v331 = vmax.f32 %v327, 0.0
    %v332 = vmax.f32 %v328, 0.0
    %v333 = vmax.f32 %v329, 0.0
    %v334 = vmax.f32 %v330, 0.0
    %v335 = vpack.c.bf16 %v331, %v331
    %v336 = vpack.c.bf16 %v332, %v332
    %v337 = vpack.c.bf16 %v333, %v333
    %v338 = vpack.c.bf16 %v334, %v334
    %v339 = vld [vmem:[#allocation7] sm:$0xff]
    %v340 = vld [vmem:[#allocation7 + $0x8] sm:$0xff]
    %v341 = vld [vmem:[#allocation7 + $0x10] sm:$0xff]
    %v342 = vld [vmem:[#allocation7 + $0x18] sm:$0xff]
    %v343 = vld [vmem:[#allocation7 + $0x20] sm:$0xff]
    %v344 = vld [vmem:[#allocation7 + $0x28] sm:$0xff]
    %v345 = vld [vmem:[#allocation7 + $0x30] sm:$0xff]
    %v346 = vld [vmem:[#allocation7 + $0x38] sm:$0xff]
    %v347 = vld [vmem:[#allocation7 + $0x40] sm:$0xff]
    %v348 = vld [vmem:[#allocation7 + $0x48] sm:$0xff]
    %v349 = vld [vmem:[#allocation7 + $0x50] sm:$0xff]
    %v350 = vld [vmem:[#allocation7 + $0x58] sm:$0xff]
    %v351 = vld [vmem:[#allocation7 + $0x60] sm:$0xff]
    %v352 = vld [vmem:[#allocation7 + $0x68] sm:$0xff]
    %v353 = vld [vmem:[#allocation7 + $0x70] sm:$0xff]
    %v354 = vld [vmem:[#allocation7 + $0x78] sm:$0xff]
    %v355 = vld [vmem:[#allocation7 + $0x80] sm:$0xff]
    %v356 = vld [vmem:[#allocation7 + $0x88] sm:$0xff]
    %v357 = vld [vmem:[#allocation7 + $0x90] sm:$0xff]
    %v358 = vld [vmem:[#allocation7 + $0x98] sm:$0xff]
    %v359 = vld [vmem:[#allocation7 + $0xa0] sm:$0xff]
    %v360 = vld [vmem:[#allocation7 + $0xa8] sm:$0xff]
    %v361 = vld [vmem:[#allocation7 + $0xb0] sm:$0xff]
    %v362 = vld [vmem:[#allocation7 + $0xb8] sm:$0xff]
    %v363 = vld [vmem:[#allocation7 + $0xc0] sm:$0xff]
    %v364 = vld [vmem:[#allocation7 + $0xc8] sm:$0xff]
    %v365 = vld [vmem:[#allocation7 + $0xd0] sm:$0xff]
    %v366 = vld [vmem:[#allocation7 + $0xd8] sm:$0xff]
    %v367 = vld [vmem:[#allocation7 + $0xe0] sm:$0xff]
    %v368 = vld [vmem:[#allocation7 + $0xe8] sm:$0xff]
    %v369 = vld [vmem:[#allocation7 + $0xf0] sm:$0xff]
    %v370 = vld [vmem:[#allocation7 + $0xf8] sm:$0xff]
    %v371 = vld [vmem:[#allocation7 + $0x100] sm:$0xff]
    %v372 = vld [vmem:[#allocation7 + $0x108] sm:$0xff]
    %v373 = vld [vmem:[#allocation7 + $0x110] sm:$0xff]
    %v374 = vld [vmem:[#allocation7 + $0x118] sm:$0xff]
    %v375 = vld [vmem:[#allocation7 + $0x120] sm:$0xff]
    %v376 = vld [vmem:[#allocation7 + $0x128] sm:$0xff]
    %v377 = vld [vmem:[#allocation7 + $0x130] sm:$0xff]
    %v378 = vld [vmem:[#allocation7 + $0x138] sm:$0xff]
    %v379 = vld [vmem:[#allocation7 + $0x140] sm:$0xff]
    %v380 = vld [vmem:[#allocation7 + $0x148] sm:$0xff]
    %v381 = vld [vmem:[#allocation7 + $0x150] sm:$0xff]
    %v382 = vld [vmem:[#allocation7 + $0x158] sm:$0xff]
    %v383 = vld [vmem:[#allocation7 + $0x160] sm:$0xff]
    %v384 = vld [vmem:[#allocation7 + $0x168] sm:$0xff]
    %v385 = vld [vmem:[#allocation7 + $0x170] sm:$0xff]
    %v386 = vld [vmem:[#allocation7 + $0x178] sm:$0xff]
    %v387 = vld [vmem:[#allocation7 + $0x180] sm:$0xff]
    %v388 = vld [vmem:[#allocation7 + $0x188] sm:$0xff]
    %v389 = vld [vmem:[#allocation7 + $0x190] sm:$0xff]
    %v390 = vld [vmem:[#allocation7 + $0x198] sm:$0xff]
    %v391 = vld [vmem:[#allocation7 + $0x1a0] sm:$0xff]
    %v392 = vld [vmem:[#allocation7 + $0x1a8] sm:$0xff]
    %v393 = vld [vmem:[#allocation7 + $0x1b0] sm:$0xff]
    %v394 = vld [vmem:[#allocation7 + $0x1b8] sm:$0xff]
    %v395 = vld [vmem:[#allocation7 + $0x1c0] sm:$0xff]
    %v396 = vld [vmem:[#allocation7 + $0x1c8] sm:$0xff]
    %v397 = vld [vmem:[#allocation7 + $0x1d0] sm:$0xff]
    %v398 = vld [vmem:[#allocation7 + $0x1d8] sm:$0xff]
    %v399 = vld [vmem:[#allocation7 + $0x1e0] sm:$0xff]
    %v400 = vld [vmem:[#allocation7 + $0x1e8] sm:$0xff]
    %v401 = vld [vmem:[#allocation7 + $0x1f0] sm:$0xff]
    %v402 = vld [vmem:[#allocation7 + $0x1f8] sm:$0xff]
    %v403 = vld [vmem:[%s6] sm:$0x3]
    %v405 = vlaneseq
    %v406 = vshrl.u32 %v405, 7
    %v407 = vsub.s32 0, %v406
    %v408 = vrot.slane %v403, %v407
    %v409 = vlaneseq
    %v410 = vshrl.u32 %v409, 7
    %v411 = vsub.s32 1, %v410
    %v412 = vrot.slane %v403, %v411
    %v479 = vunpack.c.l.b16 %v339
    %v480 = vunpack.c.h.b16 %v339
    %v481 = vunpack.c.l.b16 %v340
    %v482 = vunpack.c.h.b16 %v340
    %v483 = vunpack.c.l.b16 %v341
    %v484 = vunpack.c.h.b16 %v341
    %v485 = vunpack.c.l.b16 %v342
    %v486 = vunpack.c.h.b16 %v342
    %v487 = vunpack.c.l.b16 %v343
    %v488 = vunpack.c.h.b16 %v343
    %v489 = vunpack.c.l.b16 %v344
    %v490 = vunpack.c.h.b16 %v344
    %v491 = vunpack.c.l.b16 %v345
    %v492 = vunpack.c.h.b16 %v345
    %v493 = vunpack.c.l.b16 %v346
    %v494 = vunpack.c.h.b16 %v346
    %v495 = vunpack.c.l.b16 %v347
    %v496 = vunpack.c.h.b16 %v347
    %v497 = vunpack.c.l.b16 %v348
    %v498 = vunpack.c.h.b16 %v348
    %v499 = vunpack.c.l.b16 %v349
    %v500 = vunpack.c.h.b16 %v349
    %v501 = vunpack.c.l.b16 %v350
    %v502 = vunpack.c.h.b16 %v350
    %v503 = vunpack.c.l.b16 %v351
    %v504 = vunpack.c.h.b16 %v351
    %v505 = vunpack.c.l.b16 %v352
    %v506 = vunpack.c.h.b16 %v352
    %v507 = vunpack.c.l.b16 %v353
    %v508 = vunpack.c.h.b16 %v353
    %v509 = vunpack.c.l.b16 %v354
    %v510 = vunpack.c.h.b16 %v354
    %v511 = vunpack.c.l.b16 %v355
    %v512 = vunpack.c.h.b16 %v355
    %v513 = vunpack.c.l.b16 %v356
    %v514 = vunpack.c.h.b16 %v356
    %v515 = vunpack.c.l.b16 %v357
    %v516 = vunpack.c.h.b16 %v357
    %v517 = vunpack.c.l.b16 %v358
    %v518 = vunpack.c.h.b16 %v358
    %v519 = vunpack.c.l.b16 %v359
    %v520 = vunpack.c.h.b16 %v359
    %v521 = vunpack.c.l.b16 %v360
    %v522 = vunpack.c.h.b16 %v360
    %v523 = vunpack.c.l.b16 %v361
    %v524 = vunpack.c.h.b16 %v361
    %v525 = vunpack.c.l.b16 %v362
    %v526 = vunpack.c.h.b16 %v362
    %v527 = vunpack.c.l.b16 %v363
    %v528 = vunpack.c.h.b16 %v363
    %v529 = vunpack.c.l.b16 %v364
    %v530 = vunpack.c.h.b16 %v364
    %v531 = vunpack.c.l.b16 %v365
    %v532 = vunpack.c.h.b16 %v365
    %v533 = vunpack.c.l.b16 %v366
    %v534 = vunpack.c.h.b16 %v366
    %v535 = vunpack.c.l.b16 %v367
    %v536 = vunpack.c.h.b16 %v367
    %v537 = vunpack.c.l.b16 %v368
    %v538 = vunpack.c.h.b16 %v368
    %v539 = vunpack.c.l.b16 %v369
    %v540 = vunpack.c.h.b16 %v369
    %v541 = vunpack.c.l.b16 %v370
    %v542 = vunpack.c.h.b16 %v370
    %v543 = vunpack.c.l.b16 %v371
    %v544 = vunpack.c.h.b16 %v371
    %v545 = vunpack.c.l.b16 %v372
    %v546 = vunpack.c.h.b16 %v372
    %v547 = vunpack.c.l.b16 %v373
    %v548 = vunpack.c.h.b16 %v373
    %v549 = vunpack.c.l.b16 %v374
    %v550 = vunpack.c.h.b16 %v374
    %v551 = vunpack.c.l.b16 %v375
    %v552 = vunpack.c.h.b16 %v375
    %v553 = vunpack.c.l.b16 %v376
    %v554 = vunpack.c.h.b16 %v376
    %v555 = vunpack.c.l.b16 %v377
    %v556 = vunpack.c.h.b16 %v377
    %v557 = vunpack.c.l.b16 %v378
    %v558 = vunpack.c.h.b16 %v378
    %v559 = vunpack.c.l.b16 %v379
    %v560 = vunpack.c.h.b16 %v379
    %v561 = vunpack.c.l.b16 %v380
    %v562 = vunpack.c.h.b16 %v380
    %v563 = vunpack.c.l.b16 %v381
    %v564 = vunpack.c.h.b16 %v381
    %v565 = vunpack.c.l.b16 %v382
    %v566 = vunpack.c.h.b16 %v382
    %v567 = vunpack.c.l.b16 %v383
    %v568 = vunpack.c.h.b16 %v383
    %v569 = vunpack.c.l.b16 %v384
    %v570 = vunpack.c.h.b16 %v384
    %v571 = vunpack.c.l.b16 %v385
    %v572 = vunpack.c.h.b16 %v385
    %v573 = vunpack.c.l.b16 %v386
    %v574 = vunpack.c.h.b16 %v386
    %v575 = vunpack.c.l.b16 %v387
    %v576 = vunpack.c.h.b16 %v387
    %v577 = vunpack.c.l.b16 %v388
    %v578 = vunpack.c.h.b16 %v388
    %v579 = vunpack.c.l.b16 %v389
    %v580 = vunpack.c.h.b16 %v389
    %v581 = vunpack.c.l.b16 %v390
    %v582 = vunpack.c.h.b16 %v390
    %v583 = vunpack.c.l.b16 %v391
    %v584 = vunpack.c.h.b16 %v391
    %v585 = vunpack.c.l.b16 %v392
    %v586 = vunpack.c.h.b16 %v392
    %v587 = vunpack.c.l.b16 %v393
    %v588 = vunpack.c.h.b16 %v393
    %v589 = vunpack.c.l.b16 %v394
    %v590 = vunpack.c.h.b16 %v394
    %v591 = vunpack.c.l.b16 %v395
    %v592 = vunpack.c.h.b16 %v395
    %v593 = vunpack.c.l.b16 %v396
    %v594 = vunpack.c.h.b16 %v396
    %v595 = vunpack.c.l.b16 %v397
    %v596 = vunpack.c.h.b16 %v397
    %v597 = vunpack.c.l.b16 %v398
    %v598 = vunpack.c.h.b16 %v398
    %v599 = vunpack.c.l.b16 %v399
    %v600 = vunpack.c.h.b16 %v399
    %v601 = vunpack.c.l.b16 %v400
    %v602 = vunpack.c.h.b16 %v400
    %v603 = vunpack.c.l.b16 %v401
    %v604 = vunpack.c.h.b16 %v401
    %v605 = vunpack.c.l.b16 %v402
    %v606 = vunpack.c.h.b16 %v402
    %v607 = vpack.c.b16 %v481, %v479
    %v608 = vpack.c.b16 %v482, %v480
    %v609 = vpack.c.b16 %v485, %v483
    %v610 = vpack.c.b16 %v486, %v484
    %v611 = vpack.c.b16 %v489, %v487
    %v612 = vpack.c.b16 %v490, %v488
    %v613 = vpack.c.b16 %v493, %v491
    %v614 = vpack.c.b16 %v494, %v492
    %v615 = vpack.c.b16 %v497, %v495
    %v616 = vpack.c.b16 %v498, %v496
    %v617 = vpack.c.b16 %v501, %v499
    %v618 = vpack.c.b16 %v502, %v500
    %v619 = vpack.c.b16 %v505, %v503
    %v620 = vpack.c.b16 %v506, %v504
    %v621 = vpack.c.b16 %v509, %v507
    %v622 = vpack.c.b16 %v510, %v508
    %v623 = vpack.c.b16 %v513, %v511
    %v624 = vpack.c.b16 %v514, %v512
    %v625 = vpack.c.b16 %v517, %v515
    %v626 = vpack.c.b16 %v518, %v516
    %v627 = vpack.c.b16 %v521, %v519
    %v628 = vpack.c.b16 %v522, %v520
    %v629 = vpack.c.b16 %v525, %v523
    %v630 = vpack.c.b16 %v526, %v524
    %v631 = vpack.c.b16 %v529, %v527
    %v632 = vpack.c.b16 %v530, %v528
    %v633 = vpack.c.b16 %v533, %v531
    %v634 = vpack.c.b16 %v534, %v532
    %v635 = vpack.c.b16 %v537, %v535
    %v636 = vpack.c.b16 %v538, %v536
    %v637 = vpack.c.b16 %v541, %v539
    %v638 = vpack.c.b16 %v542, %v540
    %v639 = vpack.c.b16 %v545, %v543
    %v640 = vpack.c.b16 %v546, %v544
    %v641 = vpack.c.b16 %v549, %v547
    %v642 = vpack.c.b16 %v550, %v548
    %v643 = vpack.c.b16 %v553, %v551
    %v644 = vpack.c.b16 %v554, %v552
    %v645 = vpack.c.b16 %v557, %v555
    %v646 = vpack.c.b16 %v558, %v556
    %v647 = vpack.c.b16 %v561, %v559
    %v648 = vpack.c.b16 %v562, %v560
    %v649 = vpack.c.b16 %v565, %v563
    %v650 = vpack.c.b16 %v566, %v564
    %v651 = vpack.c.b16 %v569, %v567
    %v652 = vpack.c.b16 %v570, %v568
    %v653 = vpack.c.b16 %v573, %v571
    %v654 = vpack.c.b16 %v574, %v572
    %v655 = vpack.c.b16 %v577, %v575
    %v656 = vpack.c.b16 %v578, %v576
    %v657 = vpack.c.b16 %v581, %v579
    %v658 = vpack.c.b16 %v582, %v580
    %v659 = vpack.c.b16 %v585, %v583
    %v660 = vpack.c.b16 %v586, %v584
    %v661 = vpack.c.b16 %v589, %v587
    %v662 = vpack.c.b16 %v590, %v588
    %v663 = vpack.c.b16 %v593, %v591
    %v664 = vpack.c.b16 %v594, %v592
    %v665 = vpack.c.b16 %v597, %v595
    %v666 = vpack.c.b16 %v598, %v596
    %v667 = vpack.c.b16 %v601, %v599
    %v668 = vpack.c.b16 %v602, %v600
    %v669 = vpack.c.b16 %v605, %v603
    %v670 = vpack.c.b16 %v606, %v604
    %735 = vmatprep.subr.bf16.mxu0 %v608
    %736 = vmatpush1.bf16.msra.mxu0 %v607
    %737 = vmatprep.subr.bf16.mxu0 %v610
    %738 = vmatpush1.bf16.msra.mxu0 %v609
    %739 = vmatprep.subr.bf16.mxu0 %v612
    %740 = vmatpush1.bf16.msra.mxu0 %v611
    %741 = vmatprep.subr.bf16.mxu0 %v614
    %742 = vmatpush1.bf16.msra.mxu0 %v613
    %743 = vmatprep.subr.bf16.mxu0 %v616
    %744 = vmatpush1.bf16.msra.mxu0 %v615
    %745 = vmatprep.subr.bf16.mxu0 %v618
    %746 = vmatpush1.bf16.msra.mxu0 %v617
    %747 = vmatprep.subr.bf16.mxu0 %v620
    %748 = vmatpush1.bf16.msra.mxu0 %v619
    %749 = vmatprep.subr.bf16.mxu0 %v622
    %750 = vmatpush1.bf16.msra.mxu0 %v621
    %751 = vmatprep.subr.bf16.mxu0 %v624
    %752 = vmatpush1.bf16.msra.mxu0 %v623
    %753 = vmatprep.subr.bf16.mxu0 %v626
    %754 = vmatpush1.bf16.msra.mxu0 %v625
    %755 = vmatprep.subr.bf16.mxu0 %v628
    %756 = vmatpush1.bf16.msra.mxu0 %v627
    %757 = vmatprep.subr.bf16.mxu0 %v630
    %758 = vmatpush1.bf16.msra.mxu0 %v629
    %759 = vmatprep.subr.bf16.mxu0 %v632
    %760 = vmatpush1.bf16.msra.mxu0 %v631
    %761 = vmatprep.subr.bf16.mxu0 %v634
    %762 = vmatpush1.bf16.msra.mxu0 %v633
    %763 = vmatprep.subr.bf16.mxu0 %v636
    %764 = vmatpush1.bf16.msra.mxu0 %v635
    %765 = vmatprep.subr.bf16.mxu0 %v638
    %766 = vmatpush1.bf16.msra.mxu0 %v637
    %767 = vmatprep.mubr.bf16.mxu0 %v336
    %768 = vmatmul.mubr.bf16.gmra.mrb[0].mxu0 %v335
    %v769 = vpop.f32.mrb[0].mxu0
    %v770 = vadd.f32 %v408, %v769
    %v771 = vpop.f32.mrb[0].mxu0
    %v772 = vadd.f32 %v412, %v771
    %v773 = vpop.f32.mrb[0].mxu0
    %v774 = vpop.f32.mrb[0].mxu0
    %775 = vdwg.mxu0
    %776 = vmatprep.subr.bf16.mxu0 %v640
    %777 = vmatpush1.bf16.msra.mxu0 %v639
    %778 = vmatprep.subr.bf16.mxu0 %v642
    %779 = vmatpush1.bf16.msra.mxu0 %v641
    %780 = vmatprep.subr.bf16.mxu0 %v644
    %781 = vmatpush1.bf16.msra.mxu0 %v643
    %782 = vmatprep.subr.bf16.mxu0 %v646
    %783 = vmatpush1.bf16.msra.mxu0 %v645
    %784 = vmatprep.subr.bf16.mxu0 %v648
    %785 = vmatpush1.bf16.msra.mxu0 %v647
    %786 = vmatprep.subr.bf16.mxu0 %v650
    %787 = vmatpush1.bf16.msra.mxu0 %v649
    %788 = vmatprep.subr.bf16.mxu0 %v652
    %789 = vmatpush1.bf16.msra.mxu0 %v651
    %790 = vmatprep.subr.bf16.mxu0 %v654
    %791 = vmatpush1.bf16.msra.mxu0 %v653
    %792 = vmatprep.subr.bf16.mxu0 %v656
    %793 = vmatpush1.bf16.msra.mxu0 %v655
    %794 = vmatprep.subr.bf16.mxu0 %v658
    %795 = vmatpush1.bf16.msra.mxu0 %v657
    %796 = vmatprep.subr.bf16.mxu0 %v660
    %797 = vmatpush1.bf16.msra.mxu0 %v659
    %798 = vmatprep.subr.bf16.mxu0 %v662
    %799 = vmatpush1.bf16.msra.mxu0 %v661
    %800 = vmatprep.subr.bf16.mxu0 %v664
    %801 = vmatpush1.bf16.msra.mxu0 %v663
    %802 = vmatprep.subr.bf16.mxu0 %v666
    %803 = vmatpush1.bf16.msra.mxu0 %v665
    %804 = vmatprep.subr.bf16.mxu0 %v668
    %805 = vmatpush1.bf16.msra.mxu0 %v667
    %806 = vmatprep.subr.bf16.mxu0 %v670
    %807 = vmatpush1.bf16.msra.mxu0 %v669
    %808 = vmatprep.mubr.bf16.mxu0 %v338
    %809 = vmatmul.mubr.bf16.gmra.mrb[0].mxu0 %v337
    %v810 = vpop.f32.mrb[0].mxu0
    %v811 = vadd.f32 %v770, %v810
    %v812 = vpop.f32.mrb[0].mxu0
    %v813 = vadd.f32 %v772, %v812
    %v814 = vpop.f32.mrb[0].mxu0
    %v815 = vpop.f32.mrb[0].mxu0
    %816 = vdwg.mxu0
    %v817 = vld [vmem:[%s7] sm:$0x3]
    %v818 = vld [vmem:[%s8] sm:$0x3]
    %v819 = vadd.f32 %v811, %v813
    %820 = vadd.xlane.f32.xlu0 %v819
    %v821 = vpop.xlane.xlu0 %820
    %v822 = vmul.f32 %v811, %v811
    %v823 = vmul.f32 %v813, %v813
    %v824 = vadd.f32 %v822, %v823
    %825 = vadd.xlane.f32.xlu0 %v824
    %v826 = vpop.xlane.xlu0 %825
    %v827 = vmul.f32 %v821, 0.00390625
    %v828 = vmul.f32 %v826, 0.00390625
    %v829 = vmul.f32 %v827, %v827
    %v830 = vsub.f32 %v828, %v829
    %v831 = vsub.f32 %v811, %v827
    %v832 = vsub.f32 %v813, %v827
    %v833 = vadd.f32 %v830, 1e-05
    %v834 = vrsqrt.pop %v833
    %v835 = vmul.f32 %v831, %v834
    %v836 = vmul.f32 %v832, %v834
    %v838 = vlaneseq
    %v839 = vshrl.u32 %v838, 7
    %v840 = vsub.s32 0, %v839
    %v841 = vrot.slane %v817, %v840
    %v842 = vlaneseq
    %v843 = vshrl.u32 %v842, 7
    %v844 = vsub.s32 1, %v843
    %v845 = vrot.slane %v817, %v844
    %v848 = vmul.f32 %v835, %v841
    %v849 = vmul.f32 %v836, %v845
    %v851 = vlaneseq
    %v852 = vshrl.u32 %v851, 7
    %v853 = vsub.s32 0, %v852
    %v854 = vrot.slane %v818, %v853
    %v855 = vlaneseq
    %v856 = vshrl.u32 %v855, 7
    %v857 = vsub.s32 1, %v856
    %v858 = vrot.slane %v818, %v857
    %v861 = vadd.f32 %v848, %v854
    %v862 = vadd.f32 %v849, %v858
    %v863 = vmax.f32 %v861, 0.0
    %v864 = vmax.f32 %v862, 0.0
    %v865 = vpack.c.bf16 %v863, %v863
    %v866 = vpack.c.bf16 %v864, %v864
    %v867 = vld [vmem:[#allocation8] sm:$0xf]
    %v868 = vld [vmem:[#allocation8 + $0x4] sm:$0xf]
    %v869 = vld [vmem:[#allocation8 + $0x8] sm:$0xf]
    %v870 = vld [vmem:[#allocation8 + $0xc] sm:$0xf]
    %v871 = vld [vmem:[#allocation8 + $0x10] sm:$0xf]
    %v872 = vld [vmem:[#allocation8 + $0x14] sm:$0xf]
    %v873 = vld [vmem:[#allocation8 + $0x18] sm:$0xf]
    %v874 = vld [vmem:[#allocation8 + $0x1c] sm:$0xf]
    %v875 = vld [vmem:[#allocation8 + $0x20] sm:$0xf]
    %v876 = vld [vmem:[#allocation8 + $0x24] sm:$0xf]
    %v877 = vld [vmem:[#allocation8 + $0x28] sm:$0xf]
    %v878 = vld [vmem:[#allocation8 + $0x2c] sm:$0xf]
    %v879 = vld [vmem:[#allocation8 + $0x30] sm:$0xf]
    %v880 = vld [vmem:[#allocation8 + $0x34] sm:$0xf]
    %v881 = vld [vmem:[#allocation8 + $0x38] sm:$0xf]
    %v882 = vld [vmem:[#allocation8 + $0x3c] sm:$0xf]
    %v883 = vld [vmem:[#allocation8 + $0x40] sm:$0xf]
    %v884 = vld [vmem:[#allocation8 + $0x44] sm:$0xf]
    %v885 = vld [vmem:[#allocation8 + $0x48] sm:$0xf]
    %v886 = vld [vmem:[#allocation8 + $0x4c] sm:$0xf]
    %v887 = vld [vmem:[#allocation8 + $0x50] sm:$0xf]
    %v888 = vld [vmem:[#allocation8 + $0x54] sm:$0xf]
    %v889 = vld [vmem:[#allocation8 + $0x58] sm:$0xf]
    %v890 = vld [vmem:[#allocation8 + $0x5c] sm:$0xf]
    %v891 = vld [vmem:[#allocation8 + $0x60] sm:$0xf]
    %v892 = vld [vmem:[#allocation8 + $0x64] sm:$0xf]
    %v893 = vld [vmem:[#allocation8 + $0x68] sm:$0xf]
    %v894 = vld [vmem:[#allocation8 + $0x6c] sm:$0xf]
    %v895 = vld [vmem:[#allocation8 + $0x70] sm:$0xf]
    %v896 = vld [vmem:[#allocation8 + $0x74] sm:$0xf]
    %v897 = vld [vmem:[#allocation8 + $0x78] sm:$0xf]
    %v898 = vld [vmem:[#allocation8 + $0x7c] sm:$0xf]
    %v899 = vld [vmem:[%s10] sm:$0x1]
    %v901 = vlaneseq
    %v902 = vshrl.u32 %v901, 7
    %v903 = vsub.s32 0, %v902
    %v904 = vrot.slane %v899, %v903
    %v938 = vunpack.c.l.b16 %v867
    %v939 = vunpack.c.l.b16 %v868
    %v940 = vunpack.c.l.b16 %v869
    %v941 = vunpack.c.l.b16 %v870
    %v942 = vunpack.c.l.b16 %v871
    %v943 = vunpack.c.l.b16 %v872
    %v944 = vunpack.c.l.b16 %v873
    %v945 = vunpack.c.l.b16 %v874
    %v946 = vunpack.c.l.b16 %v875
    %v947 = vunpack.c.l.b16 %v876
    %v948 = vunpack.c.l.b16 %v877
    %v949 = vunpack.c.l.b16 %v878
    %v950 = vunpack.c.l.b16 %v879
    %v951 = vunpack.c.l.b16 %v880
    %v952 = vunpack.c.l.b16 %v881
    %v953 = vunpack.c.l.b16 %v882
    %v954 = vunpack.c.l.b16 %v883
    %v955 = vunpack.c.l.b16 %v884
    %v956 = vunpack.c.l.b16 %v885
    %v957 = vunpack.c.l.b16 %v886
    %v958 = vunpack.c.l.b16 %v887
    %v959 = vunpack.c.l.b16 %v888
    %v960 = vunpack.c.l.b16 %v889
    %v961 = vunpack.c.l.b16 %v890
    %v962 = vunpack.c.l.b16 %v891
    %v963 = vunpack.c.l.b16 %v892
    %v964 = vunpack.c.l.b16 %v893
    %v965 = vunpack.c.l.b16 %v894
    %v966 = vunpack.c.l.b16 %v895
    %v967 = vunpack.c.l.b16 %v896
    %v968 = vunpack.c.l.b16 %v897
    %v969 = vunpack.c.l.b16 %v898
    %v970 = vpack.c.b16 %v939, %v938
    %v971 = vpack.c.b16 %v941, %v940
    %v972 = vpack.c.b16 %v943, %v942
    %v973 = vpack.c.b16 %v945, %v944
    %v974 = vpack.c.b16 %v947, %v946
    %v975 = vpack.c.b16 %v949, %v948
    %v976 = vpack.c.b16 %v951, %v950
    %v977 = vpack.c.b16 %v953, %v952
    %v978 = vpack.c.b16 %v955, %v954
    %v979 = vpack.c.b16 %v957, %v956
    %v980 = vpack.c.b16 %v959, %v958
    %v981 = vpack.c.b16 %v961, %v960
    %v982 = vpack.c.b16 %v963, %v962
    %v983 = vpack.c.b16 %v965, %v964
    %v984 = vpack.c.b16 %v967, %v966
    %v985 = vpack.c.b16 %v969, %v968
    %1002 = vmatprep.subr.bf16.mxu0 0
    %1003 = vmatpush1.bf16.msra.mxu0 %v970
    %1004 = vmatprep.subr.bf16.mxu0 0
    %1005 = vmatpush1.bf16.msra.mxu0 %v971
    %1006 = vmatprep.subr.bf16.mxu0 0
    %1007 = vmatpush1.bf16.msra.mxu0 %v972
    %1008 = vmatprep.subr.bf16.mxu0 0
    %1009 = vmatpush1.bf16.msra.mxu0 %v973
    %1010 = vmatprep.subr.bf16.mxu0 0
    %1011 = vmatpush1.bf16.msra.mxu0 %v974
    %1012 = vmatprep.subr.bf16.mxu0 0
    %1013 = vmatpush1.bf16.msra.mxu0 %v975
    %1014 = vmatprep.subr.bf16.mxu0 0
    %1015 = vmatpush1.bf16.msra.mxu0 %v976
    %1016 = vmatprep.subr.bf16.mxu0 0
    %1017 = vmatpush1.bf16.msra.mxu0 %v977
    %1018 = vmatprep.subr.bf16.mxu0 0
    %1019 = vmatpush1.bf16.msra.mxu0 %v978
    %1020 = vmatprep.subr.bf16.mxu0 0
    %1021 = vmatpush1.bf16.msra.mxu0 %v979
    %1022 = vmatprep.subr.bf16.mxu0 0
    %1023 = vmatpush1.bf16.msra.mxu0 %v980
    %1024 = vmatprep.subr.bf16.mxu0 0
    %1025 = vmatpush1.bf16.msra.mxu0 %v981
    %1026 = vmatprep.subr.bf16.mxu0 0
    %1027 = vmatpush1.bf16.msra.mxu0 %v982
    %1028 = vmatprep.subr.bf16.mxu0 0
    %1029 = vmatpush1.bf16.msra.mxu0 %v983
    %1030 = vmatprep.subr.bf16.mxu0 0
    %1031 = vmatpush1.bf16.msra.mxu0 %v984
    %1032 = vmatprep.subr.bf16.mxu0 0
    %1033 = vmatpush1.bf16.msra.mxu0 %v985
    %1034 = vmatprep.mubr.bf16.mxu0 %v866
    %1035 = vmatmul.mubr.bf16.gmra.mrb[0].mxu0 %v865
    %v1036 = vpop.f32.mrb[0].mxu0
    %v1037 = vadd.f32 %v904, %v1036
    %v1038 = vpop.f32.mrb[0].mxu0
    %v1039 = vpop.f32.mrb[0].mxu0
    %v1040 = vpop.f32.mrb[0].mxu0
    %1041 = vdwg.mxu0
    %1042 = vst [vmem:[#allocation10] sm:$0xff] %v1037
    // Predicated region
    $region62: #{dqn_forward.1} parent=1 // pred_check
      _
    $region63: #{dqn_forward.1} parent=1 // pred_check_branch
      %1044 = sbr.rel (0) target = $region65
    $region64: #{dqn_forward.1} parent=1 // pred_region
      %s1046 = ssub.s32 128, 128
      %1047 = vsyncadd [#allocation4], %s1046
      %s1049 = sshll.u32 [#allocation10], 4
      %s1050 = int_to_ptr.vmem [resolvable:$true] %s1049
      %1052 = dma.vmem_to_hbm [thread:$0]  %s1050, 128, %s11, [#allocation4]
    $region65: #{dqn_forward.1} parent=1 // pred_fallthru
      _
    // Predicated region
    $region66: #{dqn_forward.1} parent=1 // pred_check
      _
    $region67: #{dqn_forward.1} parent=1 // pred_check_branch
      %1054 = sbr.rel (0) target = $region69
    $region68: #{dqn_forward.1} parent=1 // pred_region
      %1055 = dma.done [#allocation4], 128
    $region69: #{dqn_forward.1} parent=1 // pred_fallthru
      _
    %1056 = vsyncpa [#allocation3], 1
    %1057 = vsyncpa [#allocation6], 1
    %1058 = vsyncpa [#allocation9], 1
    %1059 = vsyncpa [#allocation4], 1

</llo_original>
